<compile_context>
chip_gen: v7x
topology: tpu7x:2x2x1
jax: 0.10.0
libtpu: 0.0.40
codegen_flags: <defaults>
</compile_context>

<pallas_src>
import functools

import jax
import jax.numpy as jnp
from jax import lax
from jax.experimental import pallas as pl
from jax.experimental.pallas import tpu as pltpu

WIDTH = 384            # 3 * 128 lanes = 64 complete [x, y, sin, cos, w, h] records
MAX_TILE_ROWS = 2048   # 2048 x 384 x 4B = 3 MiB per buffer


def _orientation_loss_kernel(pred_ref, true_ref, out_ref, acc_ref, *, inv_two_n):
    pid = pl.program_id(0)

    @pl.when(pid == 0)
    def _init():
        acc_ref[0] = jnp.float32(0.0)

    p = pred_ref[...].astype(jnp.float32)
    t = true_ref[...].astype(jnp.float32)

    d = p - t
    sq = d * d
    ad = jnp.abs(d)
    # smooth L1 (beta = 1.0, PyTorch default): 0.5*d^2 if |d| < 1 else |d| - 0.5
    sl1 = jnp.where(ad < 1.0, 0.5 * sq, ad - 0.5)

    # 384 lanes hold exactly 64 complete 6-wide records, so the ori-column
    # (sin/cos) mask depends only on lane % 6 -- row- and grid-step-invariant.
    lane = lax.broadcasted_iota(jnp.int32, (1, WIDTH), 1)
    lane_mod = lane % 6
    is_ori = jnp.logical_and(lane_mod >= 2, lane_mod <= 3)

    # All three sub-losses share the same denominator (2N), so one fused
    # masked sum suffices: MSE term on ori columns, smooth-L1 elsewhere.
    elem = jnp.where(is_ori, sq, sl1)          # (1, WIDTH) mask broadcasts over rows
    acc_ref[0] += jnp.sum(elem)

    @pl.when(pid == pl.num_programs(0) - 1)
    def _finalize():
        out_ref[0] = acc_ref[0] * inv_two_n


def orientation_loss(y_pred, y_true, *, max_tile_rows=MAX_TILE_ROWS):
    """Pallas-backed OrientationLoss.forward.

    Inputs: any shape flattening to (-1, 6) with features
    [x, y, sin_yaw, cos_yaw, w, h]. Returns a scalar f32.
    """
    dtype = jnp.promote_types(y_pred.dtype, y_true.dtype)
    y_pred = jnp.reshape(y_pred, (-1,)).astype(dtype)
    y_true = jnp.reshape(y_true, (-1,)).astype(dtype)
    n_elem = y_pred.shape[0]
    assert n_elem % 6 == 0, "inputs must flatten to (-1, 6)"
    n_rows_true = n_elem // 6
    inv_two_n = 1.0 / (2.0 * float(n_rows_true))   # each sub-loss is a mean over 2N elems

    # Sublane alignment for the block's second-to-last dim (8 for f32, 16 bf16, 32 i8).
    sub = max(8, 32 // jnp.dtype(dtype).itemsize)

    # Lane-dense layout: pad to (rows, WIDTH), rows a multiple of the row tile.
    rows = pl.cdiv(n_elem, WIDTH)
    rows = ((rows + sub - 1) // sub) * sub
    tile_rows = min(int(max_tile_rows), rows)
    tile_rows = ((tile_rows + sub - 1) // sub) * sub
    rows = ((rows + tile_rows - 1) // tile_rows) * tile_rows
    padded = rows * WIDTH

    def to_lane_dense(x):
        x = jnp.pad(x, (0, padded - n_elem))        # zeros: contribute 0 loss
        return jnp.reshape(x, (rows, WIDTH))

    y_pred2 = to_lane_dense(y_pred)
    y_true2 = to_lane_dense(y_true)

    grid = (rows // tile_rows,)
    kernel = functools.partial(_orientation_loss_kernel, inv_two_n=inv_two_n)

    out = pl.pallas_call(
        kernel,
        out_shape=jax.ShapeDtypeStruct((1,), jnp.float32),
        grid=grid,
        in_specs=[
            pl.BlockSpec((tile_rows, WIDTH), lambda i: (i, 0)),
            pl.BlockSpec((tile_rows, WIDTH), lambda i: (i, 0)),
        ],
        out_specs=pl.BlockSpec(memory_space=pltpu.MemorySpace.SMEM),
        scratch_shapes=[pltpu.SMEM((1,), jnp.float32)],
        compiler_params=pltpu.CompilerParams(
            dimension_semantics=("arbitrary",),
            vmem_limit_bytes=32 * 1024 * 1024),
    )(y_pred2, y_true2)
    return out[0]


def _reference_loss(y_pred, y_true):
    """Pure-JAX reference matching the PyTorch module."""
    y_pred = jnp.reshape(y_pred, (-1, 6)).astype(jnp.float32)
    y_true = jnp.reshape(y_true, (-1, 6)).astype(jnp.float32)

    def smooth_l1(a, b):
        d = a - b
        ad = jnp.abs(d)
        return jnp.mean(jnp.where(ad < 1.0, 0.5 * d * d, ad - 0.5))

    pos = smooth_l1(y_pred[:, 0:2], y_true[:, 0:2])
    size = smooth_l1(y_pred[:, 4:6], y_true[:, 4:6])
    ori = jnp.mean((y_pred[:, 2:4] - y_true[:, 2:4]) ** 2)
    return pos + ori + size


if __name__ == "__main__":
    key = jax.random.PRNGKey(0)
    k1, k2, k3, k4 = jax.random.split(key, 4)

    # Case 1: small batch, matches the module's expected (batch, 6) shape.
    y_pred = jax.random.normal(k1, (8, 6), dtype=jnp.float32) * 2.0
    y_true = jax.random.normal(k2, (8, 6), dtype=jnp.float32) * 2.0
    loss = orientation_loss(y_pred, y_true)
    jax.block_until_ready(loss)
    ref = _reference_loss(y_pred, y_true)
    assert jnp.allclose(loss, ref, rtol=1e-5, atol=1e-5), (loss, ref)

    # Case 2: larger batch with a small tile override so the multi-step grid
    # + SMEM accumulator path is exercised (grid > 1).
    y_pred2 = jax.random.normal(k3, (512, 6), dtype=jnp.float32) * 2.0
    y_true2 = jax.random.normal(k4, (512, 6), dtype=jnp.float32) * 2.0
    loss2 = orientation_loss(y_pred2, y_true2, max_tile_rows=8)
    jax.block_until_ready(loss2)
    ref2 = _reference_loss(y_pred2, y_true2)
    assert jnp.allclose(loss2, ref2, rtol=1e-5, atol=1e-5), (loss2, ref2)

    print("KERNEL_OK")
</pallas_src>

<mosaic_0001>
module attributes {stable_mosaic.version = 11 : i64} {
  func.func @_orientation_loss_kernel(%arg0: i32, %arg1: memref<8x384xf32, #tpu.memory_space<vmem>>, %arg2: memref<8x384xf32, #tpu.memory_space<vmem>>, %arg3: memref<1xf32, #tpu.memory_space<smem>>, %arg4: memref<1xf32, #tpu.memory_space<smem>>) attributes {dimension_semantics = [#tpu.dimension_semantics<arbitrary>], iteration_bounds = array<i64: 1>, scalar_prefetch = 0 : i64, scratch_operands = 1 : i64, tpu.core_type = #tpu.core_type<tc>, window_params = [{transform_indices = @transform_0, window_bounds = array<i64: 8, 384>}, {transform_indices = @transform_1, window_bounds = array<i64: 8, 384>}, {transform_indices = @transform_2, window_bounds = array<i64: 1>}]} {
    %c0_i32 = arith.constant 0 : i32
    %0 = arith.cmpi eq, %arg0, %c0_i32 : i32
    %1 = arith.extui %0 : i1 to i32
    %c0_i32_0 = arith.constant 0 : i32
    %2 = arith.cmpi ne, %1, %c0_i32_0 : i32
    scf.if %2 {
      %cst_15 = arith.constant 0.000000e+00 : f32
      %c0_16 = arith.constant 0 : index
      %50 = memref.load %arg4[%c0_16] : memref<1xf32, #tpu.memory_space<smem>>
      memref.store %cst_15, %arg4[%c0_16] : memref<1xf32, #tpu.memory_space<smem>>
    } else {
    }
    %c0 = arith.constant 0 : index
    %c0_1 = arith.constant 0 : index
    %3 = vector.load %arg1[%c0, %c0_1] : memref<8x384xf32, #tpu.memory_space<vmem>>, vector<8x384xf32>
    %c0_2 = arith.constant 0 : index
    %c0_3 = arith.constant 0 : index
    %4 = vector.load %arg2[%c0_2, %c0_3] : memref<8x384xf32, #tpu.memory_space<vmem>>, vector<8x384xf32>
    %5 = arith.subf %3, %4 : vector<8x384xf32>
    %6 = arith.mulf %5, %5 : vector<8x384xf32>
    %7 = math.absf %5 : vector<8x384xf32>
    %cst = arith.constant 1.000000e+00 : f32
    %8 = vector.broadcast %cst : f32 to vector<8x384xf32>
    %9 = arith.cmpf olt, %7, %8 : vector<8x384xf32>
    %cst_4 = arith.constant 5.000000e-01 : f32
    %10 = vector.broadcast %cst_4 : f32 to vector<8x384xf32>
    %11 = arith.mulf %10, %6 : vector<8x384xf32>
    %cst_5 = arith.constant 5.000000e-01 : f32
    %12 = vector.broadcast %cst_5 : f32 to vector<8x384xf32>
    %13 = arith.subf %7, %12 : vector<8x384xf32>
    %14 = arith.select %9, %11, %13 : vector<8x384xi1>, vector<8x384xf32>
    %15 = tpu.iota {dimensions = array<i32: 1>} : vector<1x384xi32>
    %c6_i32 = arith.constant 6 : i32
    %c0_i32_6 = arith.constant 0 : i32
    %16 = arith.cmpi eq, %c6_i32, %c0_i32_6 : i32
    %c1_i32 = arith.constant 1 : i32
    %17 = arith.select %16, %c1_i32, %c6_i32 : i32
    %18 = vector.broadcast %17 : i32 to vector<1x384xi32>
    %19 = arith.remsi %15, %18 : vector<1x384xi32>
    %c0_i32_7 = arith.constant 0 : i32
    %20 = vector.broadcast %c0_i32_7 : i32 to vector<1x384xi32>
    %21 = arith.cmpi ne, %19, %20 : vector<1x384xi32>
    %c0_i32_8 = arith.constant 0 : i32
    %22 = vector.broadcast %c0_i32_8 : i32 to vector<1x384xi32>
    %23 = arith.cmpi slt, %19, %22 : vector<1x384xi32>
    %c0_i32_9 = arith.constant 0 : i32
    %24 = arith.cmpi slt, %17, %c0_i32_9 : i32
    %25 = vector.broadcast %24 : i1 to vector<1x384xi1>
    %26 = vector.broadcast %25 : vector<1x384xi1> to vector<1x384xi1>
    %27 = arith.xori %23, %26 : vector<1x384xi1>
    %28 = arith.andi %27, %21 : vector<1x384xi1>
    %29 = vector.broadcast %17 : i32 to vector<1x384xi32>
    %30 = arith.addi %19, %29 : vector<1x384xi32>
    %31 = arith.select %28, %30, %19 : vector<1x384xi1>, vector<1x384xi32>
    %c2_i32 = arith.constant 2 : i32
    %32 = vector.broadcast %c2_i32 : i32 to vector<1x384xi32>
    %33 = arith.cmpi sge, %31, %32 : vector<1x384xi32>
    %c3_i32 = arith.constant 3 : i32
    %34 = vector.broadcast %c3_i32 : i32 to vector<1x384xi32>
    %35 = arith.cmpi sle, %31, %34 : vector<1x384xi32>
    %36 = arith.andi %33, %35 : vector<1x384xi1>
    %37 = vector.shape_cast %36 : vector<1x384xi1> to vector<1x384xi1>
    %38 = vector.broadcast %37 : vector<1x384xi1> to vector<8x384xi1>
    %39 = arith.select %38, %6, %14 : vector<8x384xi1>, vector<8x384xf32>
    %c0_10 = arith.constant 0 : index
    %40 = memref.load %arg4[%c0_10] : memref<1xf32, #tpu.memory_space<smem>>
    %41 = vector.shape_cast %39 : vector<8x384xf32> to vector<1x8x384xf32>
    %cst_11 = arith.constant dense<0.000000e+00> : vector<1xf32>
    %42 = vector.multi_reduction <add>, %41, %cst_11 [1, 2] : vector<1x8x384xf32> to vector<1xf32>
    %43 = vector.shape_cast %42 : vector<1xf32> to vector<1x1x1xf32>
    %44 = vector.extract %43[0, 0, 0] : f32 from vector<1x1x1xf32>
    %45 = arith.addf %40, %44 : f32
    %c0_12 = arith.constant 0 : index
    %46 = memref.load %arg4[%c0_12] : memref<1xf32, #tpu.memory_space<smem>>
    memref.store %45, %arg4[%c0_12] : memref<1xf32, #tpu.memory_space<smem>>
    %c0_i32_13 = arith.constant 0 : i32
    %47 = arith.cmpi eq, %arg0, %c0_i32_13 : i32
    %48 = arith.extui %47 : i1 to i32
    %c0_i32_14 = arith.constant 0 : i32
    %49 = arith.cmpi ne, %48, %c0_i32_14 : i32
    scf.if %49 {
      %c0_15 = arith.constant 0 : index
      %50 = memref.load %arg4[%c0_15] : memref<1xf32, #tpu.memory_space<smem>>
      %cst_16 = arith.constant 6.250000e-02 : f32
      %51 = arith.mulf %50, %cst_16 : f32
      %c0_17 = arith.constant 0 : index
      %52 = memref.load %arg3[%c0_17] : memref<1xf32, #tpu.memory_space<smem>>
      memref.store %51, %arg3[%c0_17] : memref<1xf32, #tpu.memory_space<smem>>
    } else {
    }
    return
  }
  func.func @transform_0(%arg0: i32) -> (i32, i32) {
    %c0_i32 = arith.constant 0 : i32
    %c0_i32_0 = arith.constant 0 : i32
    return %arg0, %c0_i32 : i32, i32
  }
  func.func @transform_1(%arg0: i32) -> (i32, i32) {
    %c0_i32 = arith.constant 0 : i32
    %c0_i32_0 = arith.constant 0 : i32
    return %arg0, %c0_i32 : i32, i32
  }
  func.func @transform_2(%arg0: i32) -> i32 {
    %c0_i32 = arith.constant 0 : i32
    %c0_i32_0 = arith.constant 0 : i32
    return %c0_i32 : i32
  }
}

</mosaic_0001>

<llo_original>
// kernel: tpu_custom_call.1
$region0: #{tpu_custom_call.1}
  #allocation0 [shape = 'u32[]', space=smem, size = 0x4, offset = 0x4, fixed_abs, tag = 'smem constant byte address 0x4 - core index']
  #allocation1 [shape = 'u32[144,128]{1,0:T(1,128)}', space=vmem, size = 0x12000, scoped, tag = 'internal scratch']
  #allocation2 [shape = 'f32[1]{0:T(128)}', space=smem, size = 0x200, scoped, tag = 'scratch operand']
  %s0 = inlined_call_operand.hbm [shape: f32[8,384], index: 0, kind: input, shape index: {}]
  %s1 = inlined_call_operand.hbm [shape: f32[8,384], index: 1, kind: input, shape index: {}]
  %s2 = inlined_call_operand.hbm [shape: f32[1], index: 2, kind: output, shape index: {}]
  %s3 = sld [smem:[#allocation0]]
  $region34: #{tpu_custom_call.1} parent=0
    _
  %s5 = ssub.s32 1, %s3
  %s6 = scalar_select 0, %s5, %s3
  $region1: #{tpu_custom_call.1} parent=0
    #allocation3 [shape = 'u8[12288]{0}', space=vmem, size = 0x3000, scoped, tag = 'input window, operand 0, single buffered']
    #allocation4 [shape = 's32[1]{0}', space=sflag, size = 0x4, scoped, tag = 'scoped memory for tpu_custom_call.1']
    #allocation5 [shape = 's32[1]{0}', space=sflag, size = 0x4, scoped, tag = 'scoped memory for tpu_custom_call.1']
    #allocation6 [shape = 'u8[12288]{0}', space=vmem, size = 0x3000, scoped, tag = 'input window, operand 1, single buffered']
    #allocation7 [shape = 's32[1]{0}', space=sflag, size = 0x4, scoped, tag = 'scoped memory for tpu_custom_call.1']
    #allocation8 [shape = 'u8[512]{0}', space=smem, size = 0x200, scoped, tag = 'output window, operand 0, single buffered']
    %7 = vsyncpa [#allocation4], 0
    %8 = vsyncpa [#allocation7], 0
    %9 = vsyncpa [#allocation5], 0
    // Predicated region
    $region2: #{tpu_custom_call.1} parent=1 // pred_check
      _
    $region3: #{tpu_custom_call.1} parent=1 // pred_check_branch
      %11 = sbr.rel (0) target = $region5
    $region4: #{tpu_custom_call.1} parent=1 // pred_region
      %s13 = ssub.s32 384, 384
      %14 = vsyncadd [#allocation4], %s13
      %s16 = sshll.u32 [#allocation3], 4
      %s17 = int_to_ptr.vmem [resolvable:$true] %s16
      %19 = dma.hbm_to_vmem [thread:$0]  %s0, 384, %s17, [#allocation4]
    $region5: #{tpu_custom_call.1} parent=1 // pred_fallthru
      _
    // Predicated region
    $region6: #{tpu_custom_call.1} parent=1 // pred_check
      _
    $region7: #{tpu_custom_call.1} parent=1 // pred_check_branch
      %21 = sbr.rel (0) target = $region9
    $region8: #{tpu_custom_call.1} parent=1 // pred_region
      %s23 = ssub.s32 384, 384
      %24 = vsyncadd [#allocation7], %s23
      %s26 = sshll.u32 [#allocation6], 4
      %s27 = int_to_ptr.vmem [resolvable:$true] %s26
      %29 = dma.hbm_to_vmem [thread:$0]  %s1, 384, %s27, [#allocation7]
    $region9: #{tpu_custom_call.1} parent=1 // pred_fallthru
      _
    // Predicated region
    $region10: #{tpu_custom_call.1} parent=1 // pred_check
      _
    $region11: #{tpu_custom_call.1} parent=1 // pred_check_branch
      %31 = sbr.rel (0) target = $region13
    $region12: #{tpu_custom_call.1} parent=1 // pred_region
      %32 = dma.done [#allocation4], 384
    $region13: #{tpu_custom_call.1} parent=1 // pred_fallthru
      _
    // Predicated region
    $region14: #{tpu_custom_call.1} parent=1 // pred_check
      _
    $region15: #{tpu_custom_call.1} parent=1 // pred_check_branch
      %34 = sbr.rel (0) target = $region17
    $region16: #{tpu_custom_call.1} parent=1 // pred_region
      %35 = dma.done [#allocation7], 384
    $region17: #{tpu_custom_call.1} parent=1 // pred_fallthru
      _
    %p36 = scmp.eq.s32.totalorder 0, 0
    // Predicated region
    $region18: #{tpu_custom_call.1} parent=1 // pred_check
      %p37 = pneg %p36
    $region19: #{tpu_custom_call.1} parent=1 // pred_check_branch
      %39 = sbr.rel (%p37) target = $region21
    $region20: #{tpu_custom_call.1} parent=1 // pred_region
      %s40 = scalar_lea.smem [#allocation2], 0
      %41 = sst [smem:[%s40]] 0.0
    $region21: #{tpu_custom_call.1} parent=1 // pred_fallthru
      _
    %v42 = vld [vmem:[#allocation3] sm:$0xff]
    %v43 = vld [vmem:[#allocation3 + $0x8] sm:$0xff]
    %v44 = vld [vmem:[#allocation3 + $0x10] sm:$0xff]
    %v45 = vld [vmem:[#allocation6] sm:$0xff]
    %v46 = vld [vmem:[#allocation6 + $0x8] sm:$0xff]
    %v47 = vld [vmem:[#allocation6 + $0x10] sm:$0xff]
    %v48 = vsub.f32 %v42, %v45
    %v49 = vsub.f32 %v43, %v46
    %v50 = vsub.f32 %v44, %v47
    %v51 = vmul.f32 %v48, %v48
    %v52 = vmul.f32 %v49, %v49
    %v53 = vmul.f32 %v50, %v50
    %v54 = vand.u32 2147483647, %v48
    %v55 = vand.u32 2147483647, %v49
    %v56 = vand.u32 2147483647, %v50
    %vm57 = vcmp.lt.f32.partialorder %v54, 1.0
    %vm58 = vcmp.lt.f32.partialorder %v55, 1.0
    %vm59 = vcmp.lt.f32.partialorder %v56, 1.0
    %v60 = vmul.f32 %v51, 0.5
    %v61 = vmul.f32 %v52, 0.5
    %v62 = vmul.f32 %v53, 0.5
    %v63 = vsub.f32 %v54, 0.5
    %v64 = vsub.f32 %v55, 0.5
    %v65 = vsub.f32 %v56, 0.5
    %v66 = vsel %vm57, %v60, %v63
    %v67 = vsel %vm58, %v61, %v64
    %v68 = vsel %vm59, %v62, %v65
    %v69 = vlaneseq
    %v70 = vand.u32 %v69, 127
    %v71 = vadd.s32 %v70, 128
    %v72 = vadd.s32 %v70, 256
    %vm73 = vcmp.lt.s32.totalorder %v70, 0
    %v74 = vsub.s32 0, %v70
    %v75 = vsel %vm73, %v74, %v70
    %v76 = vmul.u32.u64.compose %v75, 2863311531
    %v77 = vextract.low.u32 %v76
    %v78 = vextract.high.u32 %v76
    %v79 = vshrl.u32 %v78, 2
    %v80 = vmul.u32 %v79, 6
    %v81 = vsub.s32 %v75, %v80
    %v82 = vsub.s32 0, %v81
    %v83 = vsel %vm73, %v82, %v81
    %vm84 = vcmp.lt.s32.totalorder %v71, 0
    %v85 = vsub.s32 0, %v71
    %v86 = vsel %vm84, %v85, %v71
    %v87 = vmul.u32.u64.compose %v86, 2863311531
    %v88 = vextract.low.u32 %v87
    %v89 = vextract.high.u32 %v87
    %v90 = vshrl.u32 %v89, 2
    %v91 = vmul.u32 %v90, 6
    %v92 = vsub.s32 %v86, %v91
    %v93 = vsub.s32 0, %v92
    %v94 = vsel %vm84, %v93, %v92
    %vm95 = vcmp.lt.s32.totalorder %v72, 0
    %v96 = vsub.s32 0, %v72
    %v97 = vsel %vm95, %v96, %v72
    %v98 = vmul.u32.u64.compose %v97, 2863311531
    %v99 = vextract.low.u32 %v98
    %v100 = vextract.high.u32 %v98
    %v101 = vshrl.u32 %v100, 2
    %v102 = vmul.u32 %v101, 6
    %v103 = vsub.s32 %v97, %v102
    %v104 = vsub.s32 0, %v103
    %v105 = vsel %vm95, %v104, %v103
    %vm106 = vcmp.ne.s32.totalorder %v83, 0
    %vm107 = vcmp.ne.s32.totalorder %v94, 0
    %vm108 = vcmp.ne.s32.totalorder %v105, 0
    %vm109 = vcmp.lt.s32.totalorder %v83, 0
    %vm110 = vcmp.lt.s32.totalorder %v94, 0
    %vm111 = vcmp.lt.s32.totalorder %v105, 0
    %vm112 = vmand %vm109, %vm106
    %vm113 = vmand %vm110, %vm107
    %vm114 = vmand %vm111, %vm108
    %v115 = vadd.s32 %v83, 6
    %v116 = vadd.s32 %v94, 6
    %v117 = vadd.s32 %v105, 6
    %v118 = vsel %vm112, %v115, %v83
    %v119 = vsel %vm113, %v116, %v94
    %v120 = vsel %vm114, %v117, %v105
    %vm121 = vcmp.ge.s32.totalorder %v118, 2
    %vm122 = vcmp.ge.s32.totalorder %v119, 2
    %vm123 = vcmp.ge.s32.totalorder %v120, 2
    %vm124 = vcmp.le.s32.totalorder %v118, 3
    %vm125 = vcmp.le.s32.totalorder %v119, 3
    %vm126 = vcmp.le.s32.totalorder %v120, 3
    %vm127 = vmand %vm121, %vm124
    %vm128 = vmand %vm122, %vm125
    %vm129 = vmand %vm123, %vm126
    %v130 = vsel %vm127, 1, 0
    %v131 = vsel %vm128, 1, 0
    %v132 = vsel %vm129, 1, 0
    %vm133 = vcmp.eq.s32.totalorder %v130, 1
    %vm134 = vcmp.eq.s32.totalorder %v131, 1
    %vm135 = vcmp.eq.s32.totalorder %v132, 1
    %v136 = vsel %vm133, %v51, %v66
    %v137 = vsel %vm134, %v52, %v67
    %v138 = vsel %vm135, %v53, %v68
    %s139 = sld [smem:[#allocation2]]
    %v140 = vadd.f32 %v136, %v137
    %v141 = vadd.f32 %v140, %v138
    %142 = vadd.xlane.f32.xlu0 %v141
    %v143 = vpop.xlane.xlu0 %142
    %v144 = vrot.slane %v143, 4
    %v145 = vadd.f32 %v143, %v144
    %v146 = vrot.slane %v145, 2
    %v147 = vadd.f32 %v145, %v146
    %v148 = vrot.slane %v147, 1
    %v149 = vadd.f32 %v147, %v148
    %s150 = vtos %v149
    %s151 = sadd.f32 %s139, %s150
    %s152 = scalar_lea.smem [#allocation2], 0
    %153 = sst [smem:[%s152]] %s151
    // Predicated region
    $region22: #{tpu_custom_call.1} parent=1 // pred_check
      %p154 = pneg %p36
    $region23: #{tpu_custom_call.1} parent=1 // pred_check_branch
      %156 = sbr.rel (%p154) target = $region25
    $region24: #{tpu_custom_call.1} parent=1 // pred_region
      %s157 = sld [smem:[#allocation2]]
      %s158 = smul.f32 %s157, 0.0625
      %s159 = scalar_lea.smem [#allocation8], 0
      %160 = sst [smem:[%s159]] %s158
    $region25: #{tpu_custom_call.1} parent=1 // pred_fallthru
      _
    // Predicated region
    $region26: #{tpu_custom_call.1} parent=1 // pred_check
      _
    $region27: #{tpu_custom_call.1} parent=1 // pred_check_branch
      %162 = sbr.rel (0) target = $region29
    $region28: #{tpu_custom_call.1} parent=1 // pred_region
      %s164 = ssub.s32 16, 16
      %165 = vsyncadd [#allocation5], %s164
      %168 = dma.smem_to_hbm [#allocation8], 16, %s2, [#allocation5]
    $region29: #{tpu_custom_call.1} parent=1 // pred_fallthru
      _
    // Predicated region
    $region30: #{tpu_custom_call.1} parent=1 // pred_check
      _
    $region31: #{tpu_custom_call.1} parent=1 // pred_check_branch
      %170 = sbr.rel (0) target = $region33
    $region32: #{tpu_custom_call.1} parent=1 // pred_region
      %171 = dma.done [#allocation5], 16
    $region33: #{tpu_custom_call.1} parent=1 // pred_fallthru
      _
    %172 = sfence
    %173 = vsyncpa [#allocation4], 1
    %174 = vsyncpa [#allocation7], 1
    %175 = vsyncpa [#allocation5], 1

</llo_original>
